<compile_context>
chip_gen: v5e
topology: v5e:2x2
jax: 0.10.0
libtpu: 0.0.40
codegen_flags: <defaults>
</compile_context>

<pallas_src>
import functools

import jax
import jax.numpy as jnp
from jax.experimental import pallas as pl
from jax.experimental.pallas import tpu as pltpu

# args.* from the PyTorch module, fixed deterministically in-script.
NUM_ITERS_SK = 3
EPSILON_SK = 0.05
IMB_FACTOR = 10.0

_MAX_TILE_B = 1024                    # max rows per streamed B-tile
_NEG_BIG = -1e30                      # finite "-inf" for masked rows: exp -> 0
_FALLBACK_VMEM = 48 * 1024 * 1024


def _vmem_limit_bytes():
    """Per-generation VMEM budget: ~3/4 of physical (96 MiB on v5e/v6e, 48 MiB on v7x)."""
    try:
        cap = int(pltpu.get_tpu_info().vmem_capacity_bytes)
    except Exception:  # noqa: BLE001 - off-TPU / API drift -> conservative default
        return _FALLBACK_VMEM
    return int(cap * 3 // 4)


def _stats_kernel(x_ref, m_out_ref, a0_out_ref, m_sc, s_sc, *,
                  inv_eps, total_rows, need_mask):
    """Pass 1: streaming global max of logits/eps and per-class column sums of
    exp(q - max) (== Q.sum(dim=1)), online-softmax style over B-tiles."""
    t = pl.program_id(0)
    q = x_ref[...].astype(jnp.float32) * inv_eps                       # (TB, K)
    if need_mask:  # rows >= B in the (possibly uneven) last tile contribute 0
        rows = t * x_ref.shape[0] + jax.lax.broadcasted_iota(
            jnp.int32, (x_ref.shape[0], 1), 0)
        q = jnp.where(rows < total_rows, q, jnp.float32(_NEG_BIG))
    tmax = jnp.max(q, keepdims=True)                                   # (1, 1)

    @pl.when(t == 0)
    def _init():
        m_sc[...] = tmax
        s_sc[...] = jnp.sum(jnp.exp(q - tmax), axis=0, keepdims=True)

    @pl.when(t > 0)
    def _accumulate():
        m_old = m_sc[...]
        m_new = jnp.maximum(m_old, tmax)
        s_sc[...] = (s_sc[...] * jnp.exp(m_old - m_new)
                     + jnp.sum(jnp.exp(q - m_new), axis=0, keepdims=True))
        m_sc[...] = m_new

    @pl.when(t == pl.num_programs(0) - 1)
    def _finalize():
        m_out_ref[...] = m_sc[...]
        a0_out_ref[...] = s_sc[...]


def _iterate_kernel(x_ref, m_ref, r_ref, a0_ref, u_out_ref, u_sc, a_sc, *,
                    inv_eps, c_val, total_rows, need_mask):
    """Pass 2: Sinkhorn iterations in scale-vector form.

    Grid = (num_iters - 1, num_B_tiles). Phase p starts (at t == 0) by turning the
    previous column sums into u = r / colsum, then streams B-tiles accumulating the
    next column sums  a_j = sum_i P0_ij * c / (P0 u)_i.  The last step emits the
    final u (== r / a of the last phase), i.e. the column scale after `num_iters`
    column updates of the reference loop.
    """
    p = pl.program_id(0)
    t = pl.program_id(1)
    zero = jnp.float32(0.0)

    @pl.when(t == 0)
    def _start_phase():
        a_prev = jnp.where(p == 0, a0_ref[...], a_sc[...])             # (1, K)
        # shoot_infs(r / colsum): an inf only arises from colsum == 0 and only ever
        # multiplies an all-zero column, so selecting 0 there is equivalent.
        u_sc[...] = jnp.where(a_prev > zero,
                              r_ref[...] * pl.reciprocal(a_prev, approx=True), zero)
        a_sc[...] = jnp.zeros_like(a_sc)

    q = x_ref[...].astype(jnp.float32) * inv_eps                       # (TB, K)
    if need_mask:
        rows = t * x_ref.shape[0] + jax.lax.broadcasted_iota(
            jnp.int32, (x_ref.shape[0], 1), 0)
        q = jnp.where(rows < total_rows, q, jnp.float32(_NEG_BIG))
    p0 = jnp.exp(q - m_ref[0, 0])                                      # (TB, K)
    u = u_sc[...]                                                      # (1, K)

    # TODO(synk): these reductions could run on the idle MXU via dot_general matvecs.
    b = jnp.sum(p0 * u, axis=1, keepdims=True)                         # (TB,1) == Q.sum(0) tile
    v = jnp.where(b > zero, c_val * pl.reciprocal(b, approx=True), zero)
    a_sc[...] += jnp.sum(p0 * v, axis=0, keepdims=True)                # (1, K) == Q.sum(1)

    @pl.when((p == pl.num_programs(0) - 1) & (t == pl.num_programs(1) - 1))
    def _emit_u():
        a_last = a_sc[...]
        u_out_ref[...] = jnp.where(a_last > zero,
                                   r_ref[...] * pl.reciprocal(a_last, approx=True),
                                   zero)


def _normalize_kernel(x_ref, m_ref, u_ref, o_ref, *, inv_eps):
    """Pass 3: out[i, j] = P0[i, j] * u[j] / (P0 u)[i]  == (Q / Q.sum(0)).t().
    Exact reciprocal here so rows sum to 1 at f32 accuracy."""
    zero = jnp.float32(0.0)
    q = x_ref[...].astype(jnp.float32) * inv_eps
    p0 = jnp.exp(q - m_ref[0, 0])
    num = p0 * u_ref[...]                                              # (TB, K)
    row = jnp.sum(num, axis=1, keepdims=True)                          # (TB, 1)
    inv_row = jnp.where(row > zero, 1.0 / row, zero)
    o_ref[...] = (num * inv_row).astype(o_ref.dtype)


@functools.partial(jax.jit, static_argnames=("num_iters", "epsilon", "imb_factor"))
def _sinkhorn_knopp_impl(logits, num_iters, epsilon, imb_factor):
    B, K = logits.shape
    inv_eps = 1.0 / float(epsilon)
    c_val = 1.0 / float(B)                     # reference c = ones(B)/B

    vmem_limit = _vmem_limit_bytes()

    # --- B-tile sizing: in + out f32 blocks, double-buffered, with headroom ---
    row_bytes = 4 * K * 4                      # 4 bytes/elem * K * (2 in + 2 out bufs)
    tb_fit = max(8, (vmem_limit // 3) // max(row_bytes, 1))
    tb_fit = max(8, (tb_fit // 8) * 8)
    tb = int(min(_MAX_TILE_B, tb_fit))
    if B <= tb:
        tile_b, nbt, need_mask = B, 1, False   # single full-B tile, no masking
    else:
        tile_b = tb
        nbt = -(-B // tile_b)
        need_mask = (B % tile_b) != 0

    in_bytes = B * K * logits.dtype.itemsize

    # ---- pass 1: streaming global max + per-class marginals ----
    m, a0 = pl.pallas_call(
        functools.partial(_stats_kernel, inv_eps=inv_eps,
                          total_rows=B, need_mask=need_mask),
        out_shape=(jax.ShapeDtypeStruct((1, 1), jnp.float32),
                   jax.ShapeDtypeStruct((1, K), jnp.float32)),
        grid=(nbt,),
        in_specs=[pl.BlockSpec((tile_b, K), lambda t: (t, 0))],
        out_specs=(pl.BlockSpec((1, 1), lambda t: (0, 0)),
                   pl.BlockSpec((1, K), lambda t: (0, 0))),
        scratch_shapes=[pltpu.VMEM((1, 1), jnp.float32),    # running max
                        pltpu.VMEM((1, K), jnp.float32)],   # running col sums
        compiler_params=pltpu.CompilerParams(
            dimension_semantics=("arbitrary",), vmem_limit_bytes=vmem_limit),
        cost_estimate=pl.CostEstimate(flops=3 * B * K, transcendentals=B * K,
                                      bytes_accessed=in_bytes + 4 * (K + 1)),
    )(logits)

    # ---- plain-JAX glue: target class-marginal vector r (K-length ops only) ----
    marginals = a0[0, :]                                  # == Q.sum(dim=1) ordering
    order = jnp.argsort(marginals)
    idx = jnp.arange(K, dtype=jnp.float32)
    denom = float(max(K - 1, 1))                          # guard K == 1
    r = (1.0 / float(imb_factor)) ** (idx / denom) * (float(B) / float(K))
    r = r.at[order].set(jnp.sort(r))                      # r[argsort] = sort(r)[0]
    r = jnp.maximum(r, 1.0)                               # clamp(min=1)
    r = (r / jnp.sum(r)).reshape(1, K).astype(jnp.float32)

    # ---- pass 2: Sinkhorn iterations (scale-vector form) ----
    if num_iters <= 0:
        u_final = jnp.ones((1, K), jnp.float32)
    elif num_iters == 1:
        u_final = jnp.where(a0 > 0.0, r / a0, 0.0)
    else:
        u_final = pl.pallas_call(
            functools.partial(_iterate_kernel, inv_eps=inv_eps, c_val=c_val,
                              total_rows=B, need_mask=need_mask),
            out_shape=jax.ShapeDtypeStruct((1, K), jnp.float32),
            grid=(int(num_iters) - 1, nbt),
            in_specs=[
                pl.BlockSpec((tile_b, K), lambda p, t: (t, 0)),          # logits
                pl.BlockSpec(memory_space=pltpu.MemorySpace.SMEM),       # global max
                pl.BlockSpec((1, K), lambda p, t: (0, 0)),               # r
                pl.BlockSpec((1, K), lambda p, t: (0, 0)),               # a0 (pass-1 colsums)
            ],
            out_specs=pl.BlockSpec((1, K), lambda p, t: (0, 0)),
            scratch_shapes=[pltpu.VMEM((1, K), jnp.float32),   # current u
                            pltpu.VMEM((1, K), jnp.float32)],  # colsum accumulator
            compiler_params=pltpu.CompilerParams(
                dimension_semantics=("arbitrary", "arbitrary"),
                vmem_limit_bytes=vmem_limit),
            cost_estimate=pl.CostEstimate(
                flops=(int(num_iters) - 1) * 6 * B * K,
                transcendentals=(int(num_iters) - 1) * B * K,
                bytes_accessed=(int(num_iters) - 1) * in_bytes + 16 * K),
        )(logits, m, r, a0)

    # ---- pass 3: final row normalization / output (rows independent -> parallel) ----
    # TODO(synk): could alias the logits HBM buffer / emit bf16 if downstream allows.
    out = pl.pallas_call(
        functools.partial(_normalize_kernel, inv_eps=inv_eps),
        out_shape=jax.ShapeDtypeStruct((B, K), jnp.float32),
        grid=(nbt,),
        in_specs=[
            pl.BlockSpec((tile_b, K), lambda t: (t, 0)),                 # logits
            pl.BlockSpec(memory_space=pltpu.MemorySpace.SMEM),           # global max
            pl.BlockSpec((1, K), lambda t: (0, 0)),                      # u_final
        ],
        out_specs=pl.BlockSpec((tile_b, K), lambda t: (t, 0)),
        compiler_params=pltpu.CompilerParams(
            dimension_semantics=("parallel",), vmem_limit_bytes=vmem_limit),
        cost_estimate=pl.CostEstimate(flops=4 * B * K, transcendentals=B * K,
                                      bytes_accessed=in_bytes + 4 * B * K),
    )(logits, m, u_final)

    return out


def sinkhorn_knopp(logits, *, num_iters=NUM_ITERS_SK, epsilon=EPSILON_SK,
                   imb_factor=IMB_FACTOR):
    """Equivalent of SinkhornKnopp.forward(logits) with prior_P=None."""
    return _sinkhorn_knopp_impl(logits, num_iters=int(num_iters),
                                epsilon=float(epsilon), imb_factor=float(imb_factor))


if __name__ == "__main__":
    key = jax.random.PRNGKey(0)
    B, K = 8, 32                                          # logits: (batch, num_classes)
    logits = jax.random.normal(key, (B, K), dtype=jnp.float32)

    out = sinkhorn_knopp(logits)
    jax.block_until_ready(out)

    assert out.shape == (B, K)
    assert out.dtype == jnp.float32
    assert bool(jnp.all(jnp.isfinite(out)))
    assert bool(jnp.all(out >= 0.0))
    # exact final normalization => each sample's soft assignment sums to ~1
    assert bool(jnp.all(jnp.abs(jnp.sum(out, axis=1) - 1.0) < 1e-3))
    print("KERNEL_OK")
</pallas_src>

<mosaic_0001>
module attributes {stable_mosaic.version = 11 : i64} {
  func.func @_stats_kernel(%arg0: i32, %arg1: memref<8x32xf32, #tpu.memory_space<vmem>>, %arg2: memref<1x1xf32, #tpu.memory_space<vmem>>, %arg3: memref<1x32xf32, #tpu.memory_space<vmem>>, %arg4: memref<1x1xf32, #tpu.memory_space<vmem>>, %arg5: memref<1x32xf32, #tpu.memory_space<vmem>>) attributes {dimension_semantics = [#tpu.dimension_semantics<arbitrary>], iteration_bounds = array<i64: 1>, scalar_prefetch = 0 : i64, scratch_operands = 2 : i64, tpu.core_type = #tpu.core_type<tc>, window_params = [{transform_indices = @transform_0, window_bounds = array<i64: 8, 32>}, {pipeline_mode = #tpu.pipeline_mode<synchronous>, transform_indices = @transform_1, window_bounds = array<i64: 1, 1>}, {pipeline_mode = #tpu.pipeline_mode<synchronous>, transform_indices = @transform_2, window_bounds = array<i64: 1, 32>}]} {
    %c0 = arith.constant 0 : index
    %c0_0 = arith.constant 0 : index
    %0 = vector.load %arg1[%c0, %c0_0] : memref<8x32xf32, #tpu.memory_space<vmem>>, vector<8x32xf32>
    %cst = arith.constant 2.000000e+01 : f32
    %1 = vector.broadcast %cst : f32 to vector<8x32xf32>
    %2 = arith.mulf %0, %1 : vector<8x32xf32>
    %3 = vector.shape_cast %2 : vector<8x32xf32> to vector<1x8x32xf32>
    %cst_1 = arith.constant dense<0xFF800000> : vector<1xf32>
    %4 = vector.multi_reduction <maximumf>, %3, %cst_1 [1, 2] : vector<1x8x32xf32> to vector<1xf32>
    %5 = vector.shape_cast %4 : vector<1xf32> to vector<1x1x1xf32>
    %6 = vector.extract %5[0, 0, 0] : f32 from vector<1x1x1xf32>
    %7 = vector.broadcast %6 : f32 to vector<1x1xf32>
    %c0_i32 = arith.constant 0 : i32
    %8 = arith.cmpi eq, %arg0, %c0_i32 : i32
    %9 = arith.extui %8 : i1 to i32
    %c0_i32_2 = arith.constant 0 : i32
    %10 = arith.cmpi ne, %9, %c0_i32_2 : i32
    scf.if %10 {
      %c0_7 = arith.constant 0 : index
      %c0_8 = arith.constant 0 : index
      %17 = vector.load %arg4[%c0_7, %c0_8] : memref<1x1xf32, #tpu.memory_space<vmem>>, vector<1x1xf32>
      tpu.vector_store %arg4[%c0_7, %c0_8], %7 {strides = array<i32>} : memref<1x1xf32, #tpu.memory_space<vmem>>, vector<1x1xf32>,
      %18 = vector.broadcast %7 : vector<1x1xf32> to vector<8x32xf32>
      %19 = arith.subf %2, %18 : vector<8x32xf32>
      %20 = math.exp %19 : vector<8x32xf32>
      %cst_9 = arith.constant dense<0.000000e+00> : vector<32xf32>
      %21 = vector.multi_reduction <add>, %20, %cst_9 [0] : vector<8x32xf32> to vector<32xf32>
      %22 = vector.shape_cast %21 : vector<32xf32> to vector<1x32xf32>
      %c0_10 = arith.constant 0 : index
      %c0_11 = arith.constant 0 : index
      %23 = vector.load %arg5[%c0_10, %c0_11] : memref<1x32xf32, #tpu.memory_space<vmem>>, vector<1x32xf32>
      tpu.vector_store %arg5[%c0_10, %c0_11], %22 {strides = array<i32>} : memref<1x32xf32, #tpu.memory_space<vmem>>, vector<1x32xf32>,
    } else {
    }
    %c0_i32_3 = arith.constant 0 : i32
    %11 = arith.cmpi sgt, %arg0, %c0_i32_3 : i32
    %12 = arith.extui %11 : i1 to i32
    %c0_i32_4 = arith.constant 0 : i32
    %13 = arith.cmpi ne, %12, %c0_i32_4 : i32
    scf.if %13 {
      %c0_7 = arith.constant 0 : index
      %c0_8 = arith.constant 0 : index
      %17 = vector.load %arg4[%c0_7, %c0_8] : memref<1x1xf32, #tpu.memory_space<vmem>>, vector<1x1xf32>
      %18 = arith.maximumf %17, %7 : vector<1x1xf32>
      %c0_9 = arith.constant 0 : index
      %c0_10 = arith.constant 0 : index
      %19 = vector.load %arg5[%c0_9, %c0_10] : memref<1x32xf32, #tpu.memory_space<vmem>>, vector<1x32xf32>
      %20 = arith.subf %17, %18 : vector<1x1xf32>
      %21 = math.exp %20 : vector<1x1xf32>
      %22 = vector.broadcast %21 : vector<1x1xf32> to vector<1x32xf32>
      %23 = arith.mulf %19, %22 : vector<1x32xf32>
      %24 = vector.broadcast %18 : vector<1x1xf32> to vector<8x32xf32>
      %25 = arith.subf %2, %24 : vector<8x32xf32>
      %26 = math.exp %25 : vector<8x32xf32>
      %cst_11 = arith.constant dense<0.000000e+00> : vector<32xf32>
      %27 = vector.multi_reduction <add>, %26, %cst_11 [0] : vector<8x32xf32> to vector<32xf32>
      %28 = vector.shape_cast %27 : vector<32xf32> to vector<1x32xf32>
      %29 = arith.addf %23, %28 : vector<1x32xf32>
      %c0_12 = arith.constant 0 : index
      %c0_13 = arith.constant 0 : index
      %30 = vector.load %arg5[%c0_12, %c0_13] : memref<1x32xf32, #tpu.memory_space<vmem>>, vector<1x32xf32>
      tpu.vector_store %arg5[%c0_12, %c0_13], %29 {strides = array<i32>} : memref<1x32xf32, #tpu.memory_space<vmem>>, vector<1x32xf32>,
      %c0_14 = arith.constant 0 : index
      %c0_15 = arith.constant 0 : index
      %31 = vector.load %arg4[%c0_14, %c0_15] : memref<1x1xf32, #tpu.memory_space<vmem>>, vector<1x1xf32>
      tpu.vector_store %arg4[%c0_14, %c0_15], %18 {strides = array<i32>} : memref<1x1xf32, #tpu.memory_space<vmem>>, vector<1x1xf32>,
    } else {
    }
    %c0_i32_5 = arith.constant 0 : i32
    %14 = arith.cmpi eq, %arg0, %c0_i32_5 : i32
    %15 = arith.extui %14 : i1 to i32
    %c0_i32_6 = arith.constant 0 : i32
    %16 = arith.cmpi ne, %15, %c0_i32_6 : i32
    scf.if %16 {
      %c0_7 = arith.constant 0 : index
      %c0_8 = arith.constant 0 : index
      %17 = vector.load %arg4[%c0_7, %c0_8] : memref<1x1xf32, #tpu.memory_space<vmem>>, vector<1x1xf32>
      %c0_9 = arith.constant 0 : index
      %c0_10 = arith.constant 0 : index
      %18 = vector.load %arg2[%c0_9, %c0_10] : memref<1x1xf32, #tpu.memory_space<vmem>>, vector<1x1xf32>
      tpu.vector_store %arg2[%c0_9, %c0_10], %17 {strides = array<i32>} : memref<1x1xf32, #tpu.memory_space<vmem>>, vector<1x1xf32>,
      %c0_11 = arith.constant 0 : index
      %c0_12 = arith.constant 0 : index
      %19 = vector.load %arg5[%c0_11, %c0_12] : memref<1x32xf32, #tpu.memory_space<vmem>>, vector<1x32xf32>
      %c0_13 = arith.constant 0 : index
      %c0_14 = arith.constant 0 : index
      %20 = vector.load %arg3[%c0_13, %c0_14] : memref<1x32xf32, #tpu.memory_space<vmem>>, vector<1x32xf32>
      tpu.vector_store %arg3[%c0_13, %c0_14], %19 {strides = array<i32>} : memref<1x32xf32, #tpu.memory_space<vmem>>, vector<1x32xf32>,
    } else {
    }
    return
  }
  func.func @transform_0(%arg0: i32) -> (i32, i32) {
    %c0_i32 = arith.constant 0 : i32
    %c0_i32_0 = arith.constant 0 : i32
    return %arg0, %c0_i32 : i32, i32
  }
  func.func @transform_1(%arg0: i32) -> (i32, i32) {
    %c0_i32 = arith.constant 0 : i32
    %c0_i32_0 = arith.constant 0 : i32
    %c0_i32_1 = arith.constant 0 : i32
    return %c0_i32, %c0_i32_0 : i32, i32
  }
  func.func @transform_2(%arg0: i32) -> (i32, i32) {
    %c0_i32 = arith.constant 0 : i32
    %c0_i32_0 = arith.constant 0 : i32
    %c0_i32_1 = arith.constant 0 : i32
    return %c0_i32, %c0_i32_0 : i32, i32
  }
}

module attributes {stable_mosaic.version = 11 : i64} {
  func.func @_normalize_kernel(%arg0: i32, %arg1: memref<8x32xf32, #tpu.memory_space<vmem>>, %arg2: memref<1x1xf32, #tpu.memory_space<smem>>, %arg3: memref<1x32xf32, #tpu.memory_space<vmem>>, %arg4: memref<8x32xf32, #tpu.memory_space<vmem>>) attributes {dimension_semantics = [#tpu.dimension_semantics<parallel>], iteration_bounds = array<i64: 1>, scalar_prefetch = 0 : i64, scratch_operands = 0 : i64, tpu.core_type = #tpu.core_type<tc>, window_params = [{transform_indices = @transform_0, window_bounds = array<i64: 8, 32>}, {transform_indices = @transform_1, window_bounds = array<i64: 1, 1>}, {pipeline_mode = #tpu.pipeline_mode<synchronous>, transform_indices = @transform_2, window_bounds = array<i64: 1, 32>}, {transform_indices = @transform_3, window_bounds = array<i64: 8, 32>}]} {
    %c0 = arith.constant 0 : index
    %c0_0 = arith.constant 0 : index
    %0 = vector.load %arg1[%c0, %c0_0] : memref<8x32xf32, #tpu.memory_space<vmem>>, vector<8x32xf32>
    %cst = arith.constant 2.000000e+01 : f32
    %1 = vector.broadcast %cst : f32 to vector<8x32xf32>
    %2 = arith.mulf %0, %1 : vector<8x32xf32>
    %c0_1 = arith.constant 0 : index
    %c0_2 = arith.constant 0 : index
    %3 = memref.load %arg2[%c0_1, %c0_2] : memref<1x1xf32, #tpu.memory_space<smem>>
    %4 = vector.broadcast %3 : f32 to vector<8x32xf32>
    %5 = arith.subf %2, %4 : vector<8x32xf32>
    %6 = math.exp %5 : vector<8x32xf32>
    %c0_3 = arith.constant 0 : index
    %c0_4 = arith.constant 0 : index
    %7 = vector.load %arg3[%c0_3, %c0_4] : memref<1x32xf32, #tpu.memory_space<vmem>>, vector<1x32xf32>
    %8 = vector.broadcast %7 : vector<1x32xf32> to vector<8x32xf32>
    %9 = arith.mulf %6, %8 : vector<8x32xf32>
    %cst_5 = arith.constant dense<0.000000e+00> : vector<8xf32>
    %10 = vector.multi_reduction <add>, %9, %cst_5 [1] : vector<8x32xf32> to vector<8xf32>
    %11 = vector.shape_cast %10 : vector<8xf32> to vector<8x1xf32>
    %cst_6 = arith.constant 0.000000e+00 : f32
    %12 = vector.broadcast %cst_6 : f32 to vector<8x1xf32>
    %13 = arith.cmpf ogt, %11, %12 : vector<8x1xf32>
    %cst_7 = arith.constant 1.000000e+00 : f32
    %14 = vector.broadcast %cst_7 : f32 to vector<8x1xf32>
    %15 = arith.divf %14, %11 : vector<8x1xf32>
    %cst_8 = arith.constant 0.000000e+00 : f32
    %16 = vector.broadcast %cst_8 : f32 to vector<8x1xf32>
    %17 = arith.select %13, %15, %16 : vector<8x1xi1>, vector<8x1xf32>
    %18 = vector.broadcast %17 : vector<8x1xf32> to vector<8x32xf32>
    %19 = arith.mulf %9, %18 : vector<8x32xf32>
    %c0_9 = arith.constant 0 : index
    %c0_10 = arith.constant 0 : index
    %20 = vector.load %arg4[%c0_9, %c0_10] : memref<8x32xf32, #tpu.memory_space<vmem>>, vector<8x32xf32>
    tpu.vector_store %arg4[%c0_9, %c0_10], %19 {strides = array<i32>} : memref<8x32xf32, #tpu.memory_space<vmem>>, vector<8x32xf32>,
    return
  }
  func.func @transform_0(%arg0: i32) -> (i32, i32) {
    %c0_i32 = arith.constant 0 : i32
    %c0_i32_0 = arith.constant 0 : i32
    return %arg0, %c0_i32 : i32, i32
  }
  func.func @transform_1(%arg0: i32) -> (i32, i32) {
    %c0_i32 = arith.constant 0 : i32
    %c0_i32_0 = arith.constant 0 : i32
    %c0_i32_1 = arith.constant 0 : i32
    return %c0_i32, %c0_i32_0 : i32, i32
  }
  func.func @transform_2(%arg0: i32) -> (i32, i32) {
    %c0_i32 = arith.constant 0 : i32
    %c0_i32_0 = arith.constant 0 : i32
    %c0_i32_1 = arith.constant 0 : i32
    return %c0_i32, %c0_i32_0 : i32, i32
  }
  func.func @transform_3(%arg0: i32) -> (i32, i32) {
    %c0_i32 = arith.constant 0 : i32
    %c0_i32_0 = arith.constant 0 : i32
    return %arg0, %c0_i32 : i32, i32
  }
}

module attributes {stable_mosaic.version = 11 : i64} {
  func.func @_iterate_kernel(%arg0: i32, %arg1: i32, %arg2: memref<8x32xf32, #tpu.memory_space<vmem>>, %arg3: memref<1x1xf32, #tpu.memory_space<smem>>, %arg4: memref<1x32xf32, #tpu.memory_space<vmem>>, %arg5: memref<1x32xf32, #tpu.memory_space<vmem>>, %arg6: memref<1x32xf32, #tpu.memory_space<vmem>>, %arg7: memref<1x32xf32, #tpu.memory_space<vmem>>, %arg8: memref<1x32xf32, #tpu.memory_space<vmem>>) attributes {dimension_semantics = [#tpu.dimension_semantics<arbitrary>, #tpu.dimension_semantics<arbitrary>], iteration_bounds = array<i64: 2, 1>, scalar_prefetch = 0 : i64, scratch_operands = 2 : i64, tpu.core_type = #tpu.core_type<tc>, window_params = [{transform_indices = @transform_0, window_bounds = array<i64: 8, 32>}, {transform_indices = @transform_1, window_bounds = array<i64: 1, 1>}, {pipeline_mode = #tpu.pipeline_mode<synchronous>, transform_indices = @transform_2, window_bounds = array<i64: 1, 32>}, {pipeline_mode = #tpu.pipeline_mode<synchronous>, transform_indices = @transform_3, window_bounds = array<i64: 1, 32>}, {pipeline_mode = #tpu.pipeline_mode<synchronous>, transform_indices = @transform_4, window_bounds = array<i64: 1, 32>}]} {
    %c0_i32 = arith.constant 0 : i32
    %0 = arith.cmpi eq, %arg1, %c0_i32 : i32
    %1 = arith.extui %0 : i1 to i32
    %cst = arith.constant 0.000000e+00 : f32
    %c0_i32_0 = arith.constant 0 : i32
    %2 = arith.cmpi ne, %1, %c0_i32_0 : i32
    scf.if %2 {
      %c0_i32_19 = arith.constant 0 : i32
      %34 = arith.cmpi eq, %arg0, %c0_i32_19 : i32
      %c0_20 = arith.constant 0 : index
      %c0_21 = arith.constant 0 : index
      %35 = vector.load %arg5[%c0_20, %c0_21] : memref<1x32xf32, #tpu.memory_space<vmem>>, vector<1x32xf32>
      %c0_22 = arith.constant 0 : index
      %c0_23 = arith.constant 0 : index
      %36 = vector.load %arg8[%c0_22, %c0_23] : memref<1x32xf32, #tpu.memory_space<vmem>>, vector<1x32xf32>
      %37 = arith.select %34, %35, %36 : vector<1x32xf32>
      %38 = vector.broadcast %cst : f32 to vector<1x32xf32>
      %39 = arith.cmpf ogt, %37, %38 : vector<1x32xf32>
      %c0_24 = arith.constant 0 : index
      %c0_25 = arith.constant 0 : index
      %40 = vector.load %arg4[%c0_24, %c0_25] : memref<1x32xf32, #tpu.memory_space<vmem>>, vector<1x32xf32>
      %41 = tpu.reciprocal %37 {approx = true} : vector<1x32xf32> -> vector<1x32xf32>
      %42 = arith.mulf %40, %41 : vector<1x32xf32>
      %43 = vector.broadcast %cst : f32 to vector<1x32xf32>
      %44 = arith.select %39, %42, %43 : vector<1x32xi1>, vector<1x32xf32>
      %c0_26 = arith.constant 0 : index
      %c0_27 = arith.constant 0 : index
      %45 = vector.load %arg7[%c0_26, %c0_27] : memref<1x32xf32, #tpu.memory_space<vmem>>, vector<1x32xf32>
      tpu.vector_store %arg7[%c0_26, %c0_27], %44 {strides = array<i32>} : memref<1x32xf32, #tpu.memory_space<vmem>>, vector<1x32xf32>,
      %cst_28 = arith.constant 0.000000e+00 : f32
      %46 = vector.broadcast %cst_28 : f32 to vector<1x32xf32>
      %c0_29 = arith.constant 0 : index
      %c0_30 = arith.constant 0 : index
      %47 = vector.load %arg8[%c0_29, %c0_30] : memref<1x32xf32, #tpu.memory_space<vmem>>, vector<1x32xf32>
      tpu.vector_store %arg8[%c0_29, %c0_30], %46 {strides = array<i32>} : memref<1x32xf32, #tpu.memory_space<vmem>>, vector<1x32xf32>,
    } else {
    }
    %c0 = arith.constant 0 : index
    %c0_1 = arith.constant 0 : index
    %3 = vector.load %arg2[%c0, %c0_1] : memref<8x32xf32, #tpu.memory_space<vmem>>, vector<8x32xf32>
    %cst_2 = arith.constant 2.000000e+01 : f32
    %4 = vector.broadcast %cst_2 : f32 to vector<8x32xf32>
    %5 = arith.mulf %3, %4 : vector<8x32xf32>
    %c0_3 = arith.constant 0 : index
    %c0_4 = arith.constant 0 : index
    %6 = memref.load %arg3[%c0_3, %c0_4] : memref<1x1xf32, #tpu.memory_space<smem>>
    %7 = vector.broadcast %6 : f32 to vector<8x32xf32>
    %8 = arith.subf %5, %7 : vector<8x32xf32>
    %9 = math.exp %8 : vector<8x32xf32>
    %c0_5 = arith.constant 0 : index
    %c0_6 = arith.constant 0 : index
    %10 = vector.load %arg7[%c0_5, %c0_6] : memref<1x32xf32, #tpu.memory_space<vmem>>, vector<1x32xf32>
    %11 = vector.broadcast %10 : vector<1x32xf32> to vector<8x32xf32>
    %12 = arith.mulf %9, %11 : vector<8x32xf32>
    %cst_7 = arith.constant dense<0.000000e+00> : vector<8xf32>
    %13 = vector.multi_reduction <add>, %12, %cst_7 [1] : vector<8x32xf32> to vector<8xf32>
    %14 = vector.shape_cast %13 : vector<8xf32> to vector<8x1xf32>
    %cst_8 = arith.constant 0.000000e+00 : f32
    %15 = vector.broadcast %cst_8 : f32 to vector<8x1xf32>
    %16 = arith.cmpf ogt, %14, %15 : vector<8x1xf32>
    %17 = tpu.reciprocal %14 {approx = true} : vector<8x1xf32> -> vector<8x1xf32>
    %cst_9 = arith.constant 1.250000e-01 : f32
    %18 = vector.broadcast %cst_9 : f32 to vector<8x1xf32>
    %19 = arith.mulf %18, %17 : vector<8x1xf32>
    %cst_10 = arith.constant 0.000000e+00 : f32
    %20 = vector.broadcast %cst_10 : f32 to vector<8x1xf32>
    %21 = arith.select %16, %19, %20 : vector<8x1xi1>, vector<8x1xf32>
    %c0_11 = arith.constant 0 : index
    %c0_12 = arith.constant 0 : index
    %22 = vector.load %arg8[%c0_11, %c0_12] : memref<1x32xf32, #tpu.memory_space<vmem>>, vector<1x32xf32>
    %23 = vector.broadcast %21 : vector<8x1xf32> to vector<8x32xf32>
    %24 = arith.mulf %9, %23 : vector<8x32xf32>
    %cst_13 = arith.constant dense<0.000000e+00> : vector<32xf32>
    %25 = vector.multi_reduction <add>, %24, %cst_13 [0] : vector<8x32xf32> to vector<32xf32>
    %26 = vector.shape_cast %25 : vector<32xf32> to vector<1x32xf32>
    %27 = arith.addf %22, %26 : vector<1x32xf32>
    %c0_14 = arith.constant 0 : index
    %c0_15 = arith.constant 0 : index
    %28 = vector.load %arg8[%c0_14, %c0_15] : memref<1x32xf32, #tpu.memory_space<vmem>>, vector<1x32xf32>
    tpu.vector_store %arg8[%c0_14, %c0_15], %27 {strides = array<i32>} : memref<1x32xf32, #tpu.memory_space<vmem>>, vector<1x32xf32>,
    %c1_i32 = arith.constant 1 : i32
    %29 = arith.cmpi eq, %arg0, %c1_i32 : i32
    %c0_i32_16 = arith.constant 0 : i32
    %30 = arith.cmpi eq, %arg1, %c0_i32_16 : i32
    %31 = arith.andi %29, %30 : i1
    %32 = arith.extui %31 : i1 to i32
    %cst_17 = arith.constant 0.000000e+00 : f32
    %c0_i32_18 = arith.constant 0 : i32
    %33 = arith.cmpi ne, %32, %c0_i32_18 : i32
    scf.if %33 {
      %c0_19 = arith.constant 0 : index
      %c0_20 = arith.constant 0 : index
      %34 = vector.load %arg8[%c0_19, %c0_20] : memref<1x32xf32, #tpu.memory_space<vmem>>, vector<1x32xf32>
      %35 = vector.broadcast %cst_17 : f32 to vector<1x32xf32>
      %36 = arith.cmpf ogt, %34, %35 : vector<1x32xf32>
      %c0_21 = arith.constant 0 : index
      %c0_22 = arith.constant 0 : index
      %37 = vector.load %arg4[%c0_21, %c0_22] : memref<1x32xf32, #tpu.memory_space<vmem>>, vector<1x32xf32>
      %38 = tpu.reciprocal %34 {approx = true} : vector<1x32xf32> -> vector<1x32xf32>
      %39 = arith.mulf %37, %38 : vector<1x32xf32>
      %40 = vector.broadcast %cst_17 : f32 to vector<1x32xf32>
      %41 = arith.select %36, %39, %40 : vector<1x32xi1>, vector<1x32xf32>
      %c0_23 = arith.constant 0 : index
      %c0_24 = arith.constant 0 : index
      %42 = vector.load %arg6[%c0_23, %c0_24] : memref<1x32xf32, #tpu.memory_space<vmem>>, vector<1x32xf32>
      tpu.vector_store %arg6[%c0_23, %c0_24], %41 {strides = array<i32>} : memref<1x32xf32, #tpu.memory_space<vmem>>, vector<1x32xf32>,
    } else {
    }
    return
  }
  func.func @transform_0(%arg0: i32, %arg1: i32) -> (i32, i32) {
    %c0_i32 = arith.constant 0 : i32
    %c0_i32_0 = arith.constant 0 : i32
    return %arg1, %c0_i32 : i32, i32
  }
  func.func @transform_1(%arg0: i32, %arg1: i32) -> (i32, i32) {
    %c0_i32 = arith.constant 0 : i32
    %c0_i32_0 = arith.constant 0 : i32
    %c0_i32_1 = arith.constant 0 : i32
    return %c0_i32, %c0_i32_0 : i32, i32
  }
  func.func @transform_2(%arg0: i32, %arg1: i32) -> (i32, i32) {
    %c0_i32 = arith.constant 0 : i32
    %c0_i32_0 = arith.constant 0 : i32
    %c0_i32_1 = arith.constant 0 : i32
    return %c0_i32, %c0_i32_0 : i32, i32
  }
  func.func @transform_3(%arg0: i32, %arg1: i32) -> (i32, i32) {
    %c0_i32 = arith.constant 0 : i32
    %c0_i32_0 = arith.constant 0 : i32
    %c0_i32_1 = arith.constant 0 : i32
    return %c0_i32, %c0_i32_0 : i32, i32
  }
  func.func @transform_4(%arg0: i32, %arg1: i32) -> (i32, i32) {
    %c0_i32 = arith.constant 0 : i32
    %c0_i32_0 = arith.constant 0 : i32
    %c0_i32_1 = arith.constant 0 : i32
    return %c0_i32, %c0_i32_0 : i32, i32
  }
}

</mosaic_0001>

<llo_original>
// kernel: _sinkhorn_knopp_impl.3
$region0: #{_sinkhorn_knopp_impl.3}
  #allocation0 [shape = 'u32[]', space=smem, size = 0x4, offset = 0x4, fixed_abs, tag = 'smem constant byte address 0x4 - core index']
  #allocation1 [shape = 'u32[72,128]{1,0:T(1,128)}', space=vmem, size = 0x9000, scoped, tag = 'internal scratch']
  #allocation2 [shape = 'f32[1,1]{1,0:T(1,128)}', space=vmem, size = 0x200, scoped, tag = 'scratch operand']
  #allocation3 [shape = 'f32[1,32]{1,0:T(1,128)}', space=vmem, size = 0x200, scoped, tag = 'scratch operand']
  %s0 = inlined_call_operand.hbm [shape: f32[8,32], index: 0, kind: input, shape index: {}]
  %s1 = inlined_call_operand.hbm [shape: f32[1,1], index: 1, kind: output, shape index: {0}]
  %s2 = inlined_call_operand.vmem [shape: f32[1,32], index: 2, kind: output, shape index: {1}]
  %3 = xla_tuple %s1, %s2
  %s4 = sld [smem:[#allocation0]]
  $region38: #{_sinkhorn_knopp_impl.3} parent=0
    _
  %s6 = ssub.s32 1, %s4
  %s7 = scalar_select 0, %s6, %s4
  $region1: #{_sinkhorn_knopp_impl.3} parent=0
    #allocation4 [shape = 'u8[4096]{0}', space=vmem, size = 0x1000, scoped, tag = 'input window, operand 0, single buffered']
    #allocation5 [shape = 's32[1]{0}', space=sflag, size = 0x4, scoped, tag = 'scoped memory for _sinkhorn_knopp_impl.3']
    #allocation6 [shape = 's32[1]{0}', space=sflag, size = 0x4, scoped, tag = 'scoped memory for _sinkhorn_knopp_impl.3']
    #allocation7 [shape = 'u8[512]{0}', space=vmem, size = 0x400, scoped, tag = 'output window, operand 0, single buffered']
    %8 = vsyncpa [#allocation5], 0
    %9 = vsyncpa [#allocation6], 0
    // Predicated region
    $region2: #{_sinkhorn_knopp_impl.3} parent=1 // pred_check
      _
    $region3: #{_sinkhorn_knopp_impl.3} parent=1 // pred_check_branch
      %11 = sbr.rel (0) target = $region5
    $region4: #{_sinkhorn_knopp_impl.3} parent=1 // pred_region
      %13 = vsyncadd [#allocation5], 0
      %s15 = sshll.u32 %s0, 4
      %s16 = int_to_ptr.hbm [resolvable:$true] %s15
      %s17 = sshll.u32 [#allocation4], 4
      %s18 = int_to_ptr.vmem [resolvable:$true] %s17
      %20 = dma.hbm_to_vmem [thread:$0]  %s16, 128, %s18, [#allocation5]
    $region5: #{_sinkhorn_knopp_impl.3} parent=1 // pred_fallthru
      _
    // Predicated region
    $region6: #{_sinkhorn_knopp_impl.3} parent=1 // pred_check
      _
    $region7: #{_sinkhorn_knopp_impl.3} parent=1 // pred_check_branch
      %22 = sbr.rel (0) target = $region9
    $region8: #{_sinkhorn_knopp_impl.3} parent=1 // pred_region
      %24 = dma.done [#allocation5], 128
    $region9: #{_sinkhorn_knopp_impl.3} parent=1 // pred_fallthru
      _
    %v25 = vld [vmem:[#allocation4] sm:$0xff]
    %v26 = vmul.f32 %v25, 20.0
    %vm27 = vcmask 261120
    %v28 = vsel %vm27, %v26, -inf
    %29 = vmax.xlane.f32.xlu0 %v28
    %v30 = vpop.xlane.xlu0 %29
    %v31 = vrot.slane %v30, 4
    %v32 = vmax.f32 %v30, %v31
    %v33 = vrot.slane %v32, 2
    %v34 = vmax.f32 %v32, %v33
    %v35 = vrot.slane %v34, 1
    %v36 = vmax.f32 %v34, %v35
    %s37 = vtos %v36
    %v38 = vstv %s37
    %p39 = scmp.eq.s32.totalorder 0, 0
    // Predicated region
    $region10: #{_sinkhorn_knopp_impl.3} parent=1 // pred_check
      %p40 = pneg %p39
    $region11: #{_sinkhorn_knopp_impl.3} parent=1 // pred_check_branch
      %42 = sbr.rel (%p40) target = $region13
    $region12: #{_sinkhorn_knopp_impl.3} parent=1 // pred_region
      %vm43 = vcmask 0
      %44 = vst.msk [vmem:[#allocation2] sm:$0x1] %vm43, %v38
      %v45 = vsub.f32 %v26, %v38
      %v46 = vmul.f32 %v45, 1.442695
      %v47 = vpow.pop %v46
      %v48 = vsel %vm27, %v47, 0.0
      %v49 = vrot.slane %v48, 4
      %v50 = vadd.f32 %v48, %v49
      %v51 = vrot.slane %v50, 2
      %v52 = vadd.f32 %v50, %v51
      %v53 = vrot.slane %v52, 1
      %v54 = vadd.f32 %v52, %v53
      %vm55 = vcmask 253952
      %56 = vst.msk [vmem:[#allocation3] sm:$0x1] %vm55, %v54
    $region13: #{_sinkhorn_knopp_impl.3} parent=1 // pred_fallthru
      _
    %p57 = scmp.gt.s32.totalorder 0, 0
    // Predicated region
    $region14: #{_sinkhorn_knopp_impl.3} parent=1 // pred_check
      %p58 = pneg %p57
    $region15: #{_sinkhorn_knopp_impl.3} parent=1 // pred_check_branch
      %60 = sbr.rel (%p58) target = $region17
    $region16: #{_sinkhorn_knopp_impl.3} parent=1 // pred_region
      %v61 = vld [vmem:[#allocation2] sm:$0x1]
      %v62 = vmax.f32 %v61, %v38
      %v63 = vld [vmem:[#allocation3] sm:$0x1]
      %v64 = vsub.f32 %v61, %v62
      %v65 = vmul.f32 %v64, 1.442695
      %v66 = vpow.pop %v65
      %68 = vset.pattern.permute.xlu0 0
      %69 = vperm.xlu0 %68, %v66
      %v70 = vpop.permute.xlu0 %69
      %v72 = vperm.slane %v70, 0
      %v73 = vmul.f32 %v63, %v72
      %v75 = vperm.slane %v62, 0
      %76 = vset.pattern.permute.xlu0 0
      %77 = vperm.xlu0 %76, %v75
      %v78 = vpop.permute.xlu0 %77
      %v80 = vsub.f32 %v26, %v78
      %v81 = vmul.f32 %v80, 1.442695
      %v82 = vpow.pop %v81
      %v83 = vsel %vm27, %v82, 0.0
      %v84 = vrot.slane %v83, 4
      %v85 = vadd.f32 %v83, %v84
      %v86 = vrot.slane %v85, 2
      %v87 = vadd.f32 %v85, %v86
      %v88 = vrot.slane %v87, 1
      %v89 = vadd.f32 %v87, %v88
      %v90 = vadd.f32 %v73, %v89
      %vm91 = vcmask 253952
      %92 = vst.msk [vmem:[#allocation3] sm:$0x1] %vm91, %v90
      %vm93 = vcmask 0
      %94 = vst.msk [vmem:[#allocation2] sm:$0x1] %vm93, %v62
    $region17: #{_sinkhorn_knopp_impl.3} parent=1 // pred_fallthru
      _
    // Predicated region
    $region18: #{_sinkhorn_knopp_impl.3} parent=1 // pred_check
      %p95 = pneg %p39
    $region19: #{_sinkhorn_knopp_impl.3} parent=1 // pred_check_branch
      %97 = sbr.rel (%p95) target = $region21
    $region20: #{_sinkhorn_knopp_impl.3} parent=1 // pred_region
      %v98 = vld [vmem:[#allocation2] sm:$0x1]
      %vm99 = vcmask 0
      %100 = vst.msk [vmem:[#allocation7] sm:$0x1] %vm99, %v98
      %v101 = vld [vmem:[#allocation3] sm:$0x1]
      %vm102 = vcmask 253952
      %103 = vst.msk [vmem:[%s2] sm:$0x1] %vm102, %v101
    $region21: #{_sinkhorn_knopp_impl.3} parent=1 // pred_fallthru
      _
    // Predicated region
    $region22: #{_sinkhorn_knopp_impl.3} parent=1 // pred_check
      _
    $region23: #{_sinkhorn_knopp_impl.3} parent=1 // pred_check_branch
      %105 = sbr.rel (0) target = $region25
    $region24: #{_sinkhorn_knopp_impl.3} parent=1 // pred_region
      %107 = vsyncadd [#allocation6], 0
      %s109 = sshll.u32 [#allocation7], 4
      %s110 = int_to_ptr.vmem [resolvable:$true] %s109
      %s111 = sshll.u32 %s1, 4
      %s112 = int_to_ptr.hbm [resolvable:$true] %s111
      %114 = dma.vmem_to_hbm [thread:$0]  %s110, 16, %s112, [#allocation6]
    $region25: #{_sinkhorn_knopp_impl.3} parent=1 // pred_fallthru
      _
    // Predicated region
    $region26: #{_sinkhorn_knopp_impl.3} parent=1 // pred_check
      _
    $region27: #{_sinkhorn_knopp_impl.3} parent=1 // pred_check_branch
      %116 = sbr.rel (0) target = $region29
    $region28: #{_sinkhorn_knopp_impl.3} parent=1 // pred_region
      _
    $region29: #{_sinkhorn_knopp_impl.3} parent=1 // pred_fallthru
      _
    // Predicated region
    $region30: #{_sinkhorn_knopp_impl.3} parent=1 // pred_check
      _
    $region31: #{_sinkhorn_knopp_impl.3} parent=1 // pred_check_branch
      %118 = sbr.rel (0) target = $region33
    $region32: #{_sinkhorn_knopp_impl.3} parent=1 // pred_region
      %120 = dma.done [#allocation6], 16
    $region33: #{_sinkhorn_knopp_impl.3} parent=1 // pred_fallthru
      _
    // Predicated region
    $region34: #{_sinkhorn_knopp_impl.3} parent=1 // pred_check
      _
    $region35: #{_sinkhorn_knopp_impl.3} parent=1 // pred_check_branch
      %122 = sbr.rel (0) target = $region37
    $region36: #{_sinkhorn_knopp_impl.3} parent=1 // pred_region
      _
    $region37: #{_sinkhorn_knopp_impl.3} parent=1 // pred_fallthru
      _
    %123 = vsyncpa [#allocation5], 1
    %124 = vsyncpa [#allocation6], 1

// kernel: _sinkhorn_knopp_impl.5
$region0: #{_sinkhorn_knopp_impl.5}
  #allocation0 [shape = 'u32[]', space=smem, size = 0x4, offset = 0x4, fixed_abs, tag = 'smem constant byte address 0x4 - core index']
  #allocation1 [shape = 'u32[72,128]{1,0:T(1,128)}', space=vmem, size = 0x9000, scoped, tag = 'internal scratch']
  #allocation2 [shape = 'f32[1,1]{1,0:T(1,128)S(6)}', space=smem, size = 0x200, scoped, tag = 'scoped memory for _sinkhorn_knopp_impl.5']
  %s0 = inlined_call_operand.vmem [shape: f32[8,32], index: 0, kind: input, shape index: {}]
  %s1 = inlined_call_operand.<no memory space> [shape: f32[1,1], index: 1, kind: input, shape index: {}]
  %s2 = inlined_call_operand.vmem [shape: f32[1,32], index: 2, kind: input, shape index: {}]
  %s3 = inlined_call_operand.hbm [shape: f32[8,32], index: 3, kind: output, shape index: {}]
  %s4 = sld [smem:[#allocation0]]
  $region22: #{_sinkhorn_knopp_impl.5} parent=0
    _
  %s6 = ssub.s32 1, %s4
  %s7 = scalar_select 0, %s6, %s4
  %8 = sst [smem:[#allocation2]] %s1
  $region1: #{_sinkhorn_knopp_impl.5} parent=0
    #allocation3 [shape = 'u8[4096]{0}', space=vmem, size = 0x1000, scoped, tag = 'output window, operand 0, single buffered']
    #allocation4 [shape = 's32[1]{0}', space=sflag, size = 0x4, scoped, tag = 'scoped memory for _sinkhorn_knopp_impl.5']
    %9 = vsyncpa [#allocation4], 0
    // Predicated region
    $region2: #{_sinkhorn_knopp_impl.5} parent=1 // pred_check
      _
    $region3: #{_sinkhorn_knopp_impl.5} parent=1 // pred_check_branch
      %11 = sbr.rel (0) target = $region5
    $region4: #{_sinkhorn_knopp_impl.5} parent=1 // pred_region
      _
    $region5: #{_sinkhorn_knopp_impl.5} parent=1 // pred_fallthru
      _
    // Predicated region
    $region6: #{_sinkhorn_knopp_impl.5} parent=1 // pred_check
      _
    $region7: #{_sinkhorn_knopp_impl.5} parent=1 // pred_check_branch
      %13 = sbr.rel (0) target = $region9
    $region8: #{_sinkhorn_knopp_impl.5} parent=1 // pred_region
      _
    $region9: #{_sinkhorn_knopp_impl.5} parent=1 // pred_fallthru
      _
    // Predicated region
    $region10: #{_sinkhorn_knopp_impl.5} parent=1 // pred_check
      _
    $region11: #{_sinkhorn_knopp_impl.5} parent=1 // pred_check_branch
      %15 = sbr.rel (0) target = $region13
    $region12: #{_sinkhorn_knopp_impl.5} parent=1 // pred_region
      _
    $region13: #{_sinkhorn_knopp_impl.5} parent=1 // pred_fallthru
      _
    %v16 = vld [vmem:[%s0] sm:$0xff]
    %v17 = vmul.f32 %v16, 20.0
    %s18 = sld [smem:[#allocation2]]
    %v19 = vstv %s18
    %v20 = vsub.f32 %v17, %v19
    %v21 = vmul.f32 %v20, 1.442695
    %v22 = vpow.pop %v21
    %v23 = vld [vmem:[%s2] sm:$0x1]
    %v25 = vperm.slane %v23, 0
    %v27 = vmul.f32 %v22, %v25
    %vm28 = vcmask 261120
    %v29 = vsel %vm28, %v27, 0.0
    %30 = vadd.xlane.f32.xlu0 %v29
    %v31 = vpop.xlane.xlu0 %30
    %vm32 = vcmp.gt.f32.partialorder %v31, 0.0
    %v33 = vrcp.pop %v31
    %v34 = vmul.f32 %v31, %v33
    %v35 = vsub.f32 1.0, %v34
    %v36 = vmul.f32 %v33, %v35
    %v37 = vadd.f32 %v33, %v36
    %vm38 = vweird.f32 %v31
    %vm39 = vweird.f32 %v33
    %vm40 = vmor %vm38, %vm39
    %v41 = vsel %vm40, %v33, %v37
    %v42 = vand.u32 2147483647, %v31
    %vm43 = vcmp.eq.f32.partialorder %v42, 8.507059e+37
    %v44 = vand.u32 %v31, 2147483648
    %v45 = vor.u32 1.1754944e-38, %v44
    %v46 = vsel %vm43, %v45, %v41
    %v47 = vmul.f32 1.0, %v46
    %v48 = vsel %vm32, %v47, 0.0
    %v49 = vmul.f32 %v27, %v48
    %50 = vst.msk [vmem:[#allocation3] sm:$0xff] %vm28, %v49
    // Predicated region
    $region14: #{_sinkhorn_knopp_impl.5} parent=1 // pred_check
      _
    $region15: #{_sinkhorn_knopp_impl.5} parent=1 // pred_check_branch
      %52 = sbr.rel (0) target = $region17
    $region16: #{_sinkhorn_knopp_impl.5} parent=1 // pred_region
      %54 = vsyncadd [#allocation4], 0
      %s56 = sshll.u32 [#allocation3], 4
      %s57 = int_to_ptr.vmem [resolvable:$true] %s56
      %s58 = sshll.u32 %s3, 4
      %s59 = int_to_ptr.hbm [resolvable:$true] %s58
      %61 = dma.vmem_to_hbm [thread:$0]  %s57, 128, %s59, [#allocation4]
    $region17: #{_sinkhorn_knopp_impl.5} parent=1 // pred_fallthru
      _
    // Predicated region
    $region18: #{_sinkhorn_knopp_impl.5} parent=1 // pred_check
      _
    $region19: #{_sinkhorn_knopp_impl.5} parent=1 // pred_check_branch
      %63 = sbr.rel (0) target = $region21
    $region20: #{_sinkhorn_knopp_impl.5} parent=1 // pred_region
      %65 = dma.done [#allocation4], 128
    $region21: #{_sinkhorn_knopp_impl.5} parent=1 // pred_fallthru
      _
    %66 = vsyncpa [#allocation4], 1

// kernel: _sinkhorn_knopp_impl.4
$region0: #{_sinkhorn_knopp_impl.4}
  #allocation0 [shape = 'u32[]', space=smem, size = 0x4, offset = 0x4, fixed_abs, tag = 'smem constant byte address 0x4 - core index']
  #allocation1 [shape = 'u32[72,128]{1,0:T(1,128)}', space=vmem, size = 0x9000, scoped, tag = 'internal scratch']
  #allocation2 [shape = 'f32[1,32]{1,0:T(1,128)}', space=vmem, size = 0x200, scoped, tag = 'scratch operand']
  #allocation3 [shape = 'f32[1,32]{1,0:T(1,128)}', space=vmem, size = 0x200, scoped, tag = 'scratch operand']
  #allocation4 [shape = 'f32[1,1]{1,0:T(1,128)S(6)}', space=smem, size = 0x200, scoped, tag = 'scoped memory for _sinkhorn_knopp_impl.4']
  %s0 = inlined_call_operand.vmem [shape: f32[8,32], index: 0, kind: input, shape index: {}]
  %s1 = inlined_call_operand.<no memory space> [shape: f32[1,1], index: 1, kind: input, shape index: {}]
  %s2 = inlined_call_operand.vmem [shape: f32[1,32], index: 2, kind: input, shape index: {}]
  %s3 = inlined_call_operand.vmem [shape: f32[1,32], index: 3, kind: input, shape index: {}]
  %s4 = inlined_call_operand.vmem [shape: f32[1,32], index: 4, kind: output, shape index: {}]
  %s5 = sld [smem:[#allocation0]]
  $region57: #{_sinkhorn_knopp_impl.4} parent=0
    _
  %s7 = ssub.s32 1, %s5
  %s8 = scalar_select 0, %s7, %s5
  %9 = sst [smem:[#allocation4]] %s1
  loop: start=0, step=1, limit=4
  $region2: #{_sinkhorn_knopp_impl.4} parent=0 // loop_pre_header
    _
  $region3: #{_sinkhorn_knopp_impl.4} parent=0 // loop_header
    %s11 = sphi 0, %s15
    %p12 = scmp.ge.s32.totalorder %s11, 4
    %s18 = sphi 0, %s30
    %s19 = sphi 0, %s26
    %s20 = sphi 0, %s18
    %s21 = sphi 0, %s19
    %s22 = sphi 0, %s20
    %s23 = sphi 0, %s21
    %s33 = sphi 0, %s35
    %s36 = sphi 0, %s33
    %s37 = sphi 0, %s36
    %s53 = sphi 0, %s37
    %s57 = sphi 0, %s57
    %s59 = sphi 0, %s57
    %s60 = sphi 0, %s59
    %s74 = sphi 0, %s60
    %s78 = sphi 0, %s78
    %s80 = sphi 0, %s78
    %s81 = sphi 0, %s80
    %s95 = sphi 0, %s81
    %s99 = sphi 0, %s99
    %s101 = sphi 0, %s99
    %s102 = sphi 0, %s101
    %s116 = sphi 0, %s102
    %s120 = sphi 0, %s120
    %s122 = sphi 0, %s120
    %s123 = sphi 0, %s122
    %s137 = sphi 0, %s123
  $region4: #{_sinkhorn_knopp_impl.4} parent=0 // loop_header_branch
    %14 = sbr.rel (%p12) target = $region8
  $region5: #{_sinkhorn_knopp_impl.4} parent=0 // loop_body
    %s16 = ssub.s32 %s11, 1
    %s17 = ssub.s32 %s11, 2
    %s24 = sadd.s32 1, %s19
    %p25 = scmp.ge.s32.totalorder %s24, 1
    %s26 = scalar_select %p25, 0, %s24
    %s27 = sadd.s32 1, %s18
    %s28 = scalar_select %p25, %s27, %s18
    %p29 = scmp.ge.s32.totalorder %s28, 2
    %s30 = scalar_select %p29, 0, %s28
    %s31 = ssub.s32 %s19, %s26
    %p32 = scmp.eq.s32.totalorder %s31, 0
    %s34 = sadd.s32 %s33, 1
    %s35 = scalar_select %p32, %s33, %s34
    %p38 = pneg %p32
    %p39 = scmp.eq.s32.totalorder %s11, 1
    %p40 = por %p38, %p39
    %p41 = scmp.ne.s32.totalorder %s33, %s36
    %p42 = scmp.eq.s32.totalorder %s11, 0
    %p43 = por %p41, %p42
    %p44 = scmp.ne.s32.totalorder %s33, %s36
    %p45 = scmp.eq.s32.totalorder %s16, 1
    %p46 = por %p44, %p45
    %p47 = scmp.ne.s32.totalorder %s36, %s37
    %p48 = scmp.eq.s32.totalorder %s16, 0
    %p49 = por %p47, %p48
    %p50 = scmp.ne.s32.totalorder %s36, %s37
    %p51 = scmp.eq.s32.totalorder %s17, 1
    %p52 = por %p50, %p51
    %p54 = scmp.ne.s32.totalorder %s37, %s53
    %p55 = scmp.eq.s32.totalorder %s17, 0
    %p56 = por %p54, %p55
    %s58 = sadd.s32 %s57, 1
    %p61 = scmp.eq.s32.totalorder %s11, 1
    %p62 = scmp.ne.s32.totalorder %s57, %s59
    %p63 = scmp.eq.s32.totalorder %s11, 0
    %p64 = por %p62, %p63
    %p65 = scmp.ne.s32.totalorder %s57, %s59
    %p66 = scmp.eq.s32.totalorder %s16, 1
    %p67 = por %p65, %p66
    %p68 = scmp.ne.s32.totalorder %s59, %s60
    %p69 = scmp.eq.s32.totalorder %s16, 0
    %p70 = por %p68, %p69
    %p71 = scmp.ne.s32.totalorder %s59, %s60
    %p72 = scmp.eq.s32.totalorder %s17, 1
    %p73 = por %p71, %p72
    %p75 = scmp.ne.s32.totalorder %s60, %s74
    %p76 = scmp.eq.s32.totalorder %s17, 0
    %p77 = por %p75, %p76
    %s79 = sadd.s32 %s78, 1
    %p82 = scmp.eq.s32.totalorder %s11, 1
    %p83 = scmp.ne.s32.totalorder %s78, %s80
    %p84 = scmp.eq.s32.totalorder %s11, 0
    %p85 = por %p83, %p84
    %p86 = scmp.ne.s32.totalorder %s78, %s80
    %p87 = scmp.eq.s32.totalorder %s16, 1
    %p88 = por %p86, %p87
    %p89 = scmp.ne.s32.totalorder %s80, %s81
    %p90 = scmp.eq.s32.totalorder %s16, 0
    %p91 = por %p89, %p90
    %p92 = scmp.ne.s32.totalorder %s80, %s81
    %p93 = scmp.eq.s32.totalorder %s17, 1
    %p94 = por %p92, %p93
    %p96 = scmp.ne.s32.totalorder %s81, %s95
    %p97 = scmp.eq.s32.totalorder %s17, 0
    %p98 = por %p96, %p97
    %s100 = sadd.s32 %s99, 1
    %p103 = scmp.eq.s32.totalorder %s11, 1
    %p104 = scmp.ne.s32.totalorder %s99, %s101
    %p105 = scmp.eq.s32.totalorder %s11, 0
    %p106 = por %p104, %p105
    %p107 = scmp.ne.s32.totalorder %s99, %s101
    %p108 = scmp.eq.s32.totalorder %s16, 1
    %p109 = por %p107, %p108
    %p110 = scmp.ne.s32.totalorder %s101, %s102
    %p111 = scmp.eq.s32.totalorder %s16, 0
    %p112 = por %p110, %p111
    %p113 = scmp.ne.s32.totalorder %s101, %s102
    %p114 = scmp.eq.s32.totalorder %s17, 1
    %p115 = por %p113, %p114
    %p117 = scmp.ne.s32.totalorder %s102, %s116
    %p118 = scmp.eq.s32.totalorder %s17, 0
    %p119 = por %p117, %p118
    %s121 = sadd.s32 %s120, 1
    %p124 = scmp.eq.s32.totalorder %s11, 1
    %p125 = scmp.ne.s32.totalorder %s120, %s122
    %p126 = scmp.eq.s32.totalorder %s11, 0
    %p127 = por %p125, %p126
    %p128 = scmp.ne.s32.totalorder %s120, %s122
    %p129 = scmp.eq.s32.totalorder %s16, 1
    %p130 = por %p128, %p129
    %p131 = scmp.ne.s32.totalorder %s122, %s123
    %p132 = scmp.eq.s32.totalorder %s16, 0
    %p133 = por %p131, %p132
    %p134 = scmp.ne.s32.totalorder %s122, %s123
    %p135 = scmp.eq.s32.totalorder %s17, 1
    %p136 = por %p134, %p135
    %p138 = scmp.ne.s32.totalorder %s123, %s137
    %p139 = scmp.eq.s32.totalorder %s17, 0
    %p140 = por %p138, %p139
    %p141 = scmp.le.s32.totalorder 1, %s11
    %p142 = scmp.lt.s32.totalorder %s11, 3
    %p143 = pnand %p141, %p142
    %p144 = pneg %p143
    // Predicated region
    $region9: #{_sinkhorn_knopp_impl.4} parent=5 // pred_check
      _
    $region10: #{_sinkhorn_knopp_impl.4} parent=5 // pred_check_branch
      %146 = sbr.rel (%p143) target = $region12
    $region11: #{_sinkhorn_knopp_impl.4} parent=5 // pred_region
      %s147 = ssub.s32 %s11, 1
      // Predicated region
      $region13: #{_sinkhorn_knopp_impl.4} parent=11 // pred_check
        %p148 = pneg %p49
      $region14: #{_sinkhorn_knopp_impl.4} parent=11 // pred_check_branch
        %150 = sbr.rel (%p148) target = $region16
      $region15: #{_sinkhorn_knopp_impl.4} parent=11 // pred_region
        %p151 = scmp.lt.s32.totalorder %s21, 0
        %s152 = scalar_select %p151, %s21, 0
        %s153 = smul.addr %s152, 8
        %s154 = scalar_lea.vmem %s0, %s153
      $region16: #{_sinkhorn_knopp_impl.4} parent=11 // pred_fallthru
        _
      // Predicated region
      $region17: #{_sinkhorn_knopp_impl.4} parent=11 // pred_check
        %p155 = pneg %p70
      $region18: #{_sinkhorn_knopp_impl.4} parent=11 // pred_check_branch
        %157 = sbr.rel (%p155) target = $region20
      $region19: #{_sinkhorn_knopp_impl.4} parent=11 // pred_region
        _
      $region20: #{_sinkhorn_knopp_impl.4} parent=11 // pred_fallthru
        _
      // Predicated region
      $region21: #{_sinkhorn_knopp_impl.4} parent=11 // pred_check
        %p158 = pneg %p91
      $region22: #{_sinkhorn_knopp_impl.4} parent=11 // pred_check_branch
        %160 = sbr.rel (%p158) target = $region24
      $region23: #{_sinkhorn_knopp_impl.4} parent=11 // pred_region
        _
      $region24: #{_sinkhorn_knopp_impl.4} parent=11 // pred_fallthru
        _
      // Predicated region
      $region25: #{_sinkhorn_knopp_impl.4} parent=11 // pred_check
        %p161 = pneg %p112
      $region26: #{_sinkhorn_knopp_impl.4} parent=11 // pred_check_branch
        %163 = sbr.rel (%p161) target = $region28
      $region27: #{_sinkhorn_knopp_impl.4} parent=11 // pred_region
        _
      $region28: #{_sinkhorn_knopp_impl.4} parent=11 // pred_fallthru
        _
    $region12: #{_sinkhorn_knopp_impl.4} parent=5 // pred_fallthru
      _
    %p164 = scmp.lt.s32.totalorder %s11, 2
    // Predicated region
    $region29: #{_sinkhorn_knopp_impl.4} parent=5 // pred_check
      %p165 = pneg %p164
    $region30: #{_sinkhorn_knopp_impl.4} parent=5 // pred_check_branch
      %167 = sbr.rel (%p165) target = $region32
    $region31: #{_sinkhorn_knopp_impl.4} parent=5 // pred_region
      _
    $region32: #{_sinkhorn_knopp_impl.4} parent=5 // pred_fallthru
      _
    %p168 = scmp.le.s32.totalorder 1, %s11
    %p169 = scmp.lt.s32.totalorder %s11, 3
    %p170 = pnand %p168, %p169
    %p171 = pneg %p170
    // Predicated region
    $region33: #{_sinkhorn_knopp_impl.4} parent=5 // pred_check
      _
    $region34: #{_sinkhorn_knopp_impl.4} parent=5 // pred_check_branch
      %173 = sbr.rel (%p170) target = $region36
    $region35: #{_sinkhorn_knopp_impl.4} parent=5 // pred_region
      %s174 = ssub.s32 %s11, 1
      %p175 = scmp.lt.s32.totalorder %s21, 0
      %s176 = scalar_select %p175, %s21, 0
      %s177 = smul.addr %s176, 8
      %s178 = scalar_lea.vmem %s0, %s177
      %p179 = pneg %p49
      %p180 = pneg %p46
      %p181 = pneg %p70
      %p182 = pneg %p67
      %p183 = pneg %p91
      %p184 = pneg %p88
      %p185 = pneg %p112
      %p186 = pneg %p109
      %p187 = pneg %p133
      %p188 = pneg %p130
      %p189 = scmp.lt.s32.totalorder %s21, 0
      %s190 = scalar_select %p189, %s21, 0
      %s191 = smul.addr %s190, 8
      %s192 = scalar_lea.vmem %s0, %s191
      %p193 = scmp.eq.s32.totalorder %s21, 0
      // Predicated region
      $region37: #{_sinkhorn_knopp_impl.4} parent=35 // pred_check
        %p194 = pneg %p193
      $region38: #{_sinkhorn_knopp_impl.4} parent=35 // pred_check_branch
        %196 = sbr.rel (%p194) target = $region40
      $region39: #{_sinkhorn_knopp_impl.4} parent=35 // pred_region
        %p197 = scmp.eq.s32.totalorder %s20, 0
        %v198 = vld [vmem:[%s3] sm:$0x1]
        %v199 = vld [vmem:[#allocation3] sm:$0x1]
        %s200 = scalar_select %p197, 1, 0
        %v201 = vstv %s200
        %vm202 = vcmp.eq.s32.totalorder %v201, 1
        %v203 = vsel %vm202, %v198, %v199
        %vm204 = vcmp.gt.f32.partialorder %v203, 0.0
        %v205 = vld [vmem:[%s2] sm:$0x1]
        %v206 = vrcp.pop %v203
        %v207 = vmul.f32 %v205, %v206
        %v208 = vsel %vm204, %v207, 0.0
        %vm209 = vcmask 253952
        %210 = vst.msk [vmem:[#allocation2] sm:$0x1] %vm209, %v208
        %211 = vst.msk [vmem:[#allocation3] sm:$0x1] %vm209, 0.0
      $region40: #{_sinkhorn_knopp_impl.4} parent=35 // pred_fallthru
        _
      %v212 = vld [vmem:[%s192] sm:$0xff]
      %v213 = vmul.f32 %v212, 20.0
      %s214 = sld [smem:[#allocation4]]
      %v215 = vstv %s214
      %v216 = vsub.f32 %v213, %v215
      %v217 = vmul.f32 %v216, 1.442695
      %v218 = vpow.pop %v217
      %v219 = vld [vmem:[#allocation2] sm:$0x1]
      %v221 = vperm.slane %v219, 0
      %v223 = vmul.f32 %v218, %v221
      %vm224 = vcmask 261120
      %v225 = vsel %vm224, %v223, 0.0
      %226 = vadd.xlane.f32.xlu0 %v225
      %v227 = vpop.xlane.xlu0 %226
      %vm228 = vcmp.gt.f32.partialorder %v227, 0.0
      %v229 = vrcp.pop %v227
      %v230 = vmul.f32 %v229, 0.125
      %v231 = vsel %vm228, %v230, 0.0
      %v232 = vld [vmem:[#allocation3] sm:$0x1]
      %v233 = vmul.f32 %v218, %v231
      %v234 = vsel %vm224, %v233, 0.0
      %v235 = vrot.slane %v234, 4
      %v236 = vadd.f32 %v234, %v235
      %v237 = vrot.slane %v236, 2
      %v238 = vadd.f32 %v236, %v237
      %v239 = vrot.slane %v238, 1
      %v240 = vadd.f32 %v238, %v239
      %v241 = vadd.f32 %v232, %v240
      %vm242 = vcmask 253952
      %243 = vst.msk [vmem:[#allocation3] sm:$0x1] %vm242, %v241
      %p244 = scmp.eq.s32.totalorder %s20, 1
      %p245 = pnand %p244, %p193
      %p246 = pneg %p245
      // Predicated region
      $region41: #{_sinkhorn_knopp_impl.4} parent=35 // pred_check
        _
      $region42: #{_sinkhorn_knopp_impl.4} parent=35 // pred_check_branch
        %248 = sbr.rel (%p245) target = $region44
      $region43: #{_sinkhorn_knopp_impl.4} parent=35 // pred_region
        %v249 = vld [vmem:[#allocation3] sm:$0x1]
        %vm250 = vcmp.gt.f32.partialorder %v249, 0.0
        %v251 = vld [vmem:[%s2] sm:$0x1]
        %v252 = vrcp.pop %v249
        %v253 = vmul.f32 %v251, %v252
        %v254 = vsel %vm250, %v253, 0.0
        %255 = vst.msk [vmem:[%s4] sm:$0x1] %vm242, %v254
      $region44: #{_sinkhorn_knopp_impl.4} parent=35 // pred_fallthru
        _
      // Predicated region
      $region45: #{_sinkhorn_knopp_impl.4} parent=35 // pred_check
        %p256 = pneg %p130
      $region46: #{_sinkhorn_knopp_impl.4} parent=35 // pred_check_branch
        %258 = sbr.rel (%p256) target = $region48
      $region47: #{_sinkhorn_knopp_impl.4} parent=35 // pred_region
        _
      $region48: #{_sinkhorn_knopp_impl.4} parent=35 // pred_fallthru
        _
      // Predicated region
      $region49: #{_sinkhorn_knopp_impl.4} parent=35 // pred_check
        %p259 = pneg %p130
      $region50: #{_sinkhorn_knopp_impl.4} parent=35 // pred_check_branch
        %261 = sbr.rel (%p259) target = $region52
      $region51: #{_sinkhorn_knopp_impl.4} parent=35 // pred_region
        _
      $region52: #{_sinkhorn_knopp_impl.4} parent=35 // pred_fallthru
        _
    $region36: #{_sinkhorn_knopp_impl.4} parent=5 // pred_fallthru
      _
    %p262 = scmp.le.s32.totalorder 2, %s11
    // Predicated region
    $region53: #{_sinkhorn_knopp_impl.4} parent=5 // pred_check
      %p263 = pneg %p262
    $region54: #{_sinkhorn_knopp_impl.4} parent=5 // pred_check_branch
      %265 = sbr.rel (%p263) target = $region56
    $region55: #{_sinkhorn_knopp_impl.4} parent=5 // pred_region
      %s266 = ssub.s32 %s11, 2
    $region56: #{_sinkhorn_knopp_impl.4} parent=5 // pred_fallthru
      _
  $region6: #{_sinkhorn_knopp_impl.4} parent=0 // loop_footer
    %s15 = sadd.s32 1, %s11
  $region7: #{_sinkhorn_knopp_impl.4} parent=0 // loop_footer_branch
    %10 = sbr.rel target = $region3
  $region8: #{_sinkhorn_knopp_impl.4} parent=0 // loop_exit
    _

</llo_original>
